<compile_context>
chip_gen: v6e
topology: v6e:2x2x1
jax: 0.10.0
libtpu: 0.0.40
codegen_flags: <defaults>
</compile_context>

<pallas_src>
import functools

import jax
import jax.numpy as jnp
from jax.scipy.linalg import block_diag
from jax.experimental import pallas as pl
from jax.experimental.pallas import tpu as pltpu

EPS = 1e-5
LANE = 128


def _round_up(x, m):
    return (x + m - 1) // m * m


# --------------------------------------------------------------------------
# Single fused forward kernel
# --------------------------------------------------------------------------
def _make_fused_kernel(cur_dim, th, opad):
    # Row layout of the packed vector slab.
    (R_BEXT, R_B1F, R_DSB, R_B2, R_LN2G, R_LN2B,
     R_B3, R_B4, R_BNA, R_BNC, R_OUTB) = range(11)

    dot = functools.partial(jnp.dot, preferred_element_type=jnp.float32)

    def kernel(x_ref, wext_ref, sa_ref, sb_ref, wout_ref, vec_ref, o_ref):
        x = x_ref[...]            # [TB, IN_TOTAL]  concat of raw modality inputs
        V = vec_ref[...]          # [VROWS, SLAB_W] packed small parameter vectors

        def vec(row, width):
            return V[row:row + 1, :width]

        # ---- modules_to_fuse (Linear per modality, block-diag) + feature concat ----
        fused = dot(x, wext_ref[...]) + vec(R_BEXT, cur_dim)          # [TB, CUR]

        # ---- MLPResidualBlock 1: cur_dim -> H, all tasks lane-batched ----
        # LayerNorm gamma/beta folded into fc1 weight/bias -> one shared normalization.
        mu = jnp.mean(fused, axis=-1, keepdims=True)
        var = jnp.mean((fused - mu) ** 2, axis=-1, keepdims=True)
        z = (fused - mu) * jax.lax.rsqrt(var + EPS)
        identity = dot(fused, sa_ref[1]) + vec(R_DSB, th)    # downsample(x), full_preactivation=False
        h = dot(z, sa_ref[0]) + vec(R_B1F, th)               # (LN gamma/beta ∘ fc1) folded
        h = h * jax.nn.sigmoid(h)                            # Swish; Dropout(0) = identity
        h = dot(h, sb_ref[1]) + vec(R_B2, th)                # fc2 (block-diag over tasks)
        x1 = h + identity                                    # StochasticDepth(0) = identity

        # ---- MLPResidualBlock 2: H -> H, identity residual ----
        # Per-task LayerNorm over H-wide lane chunks via block-diag averaging matmul.
        mavg = sb_ref[0]
        mu2 = dot(x1, mavg)
        d = x1 - mu2
        var2 = dot(d * d, mavg)
        xn2 = d * jax.lax.rsqrt(var2 + EPS) * vec(R_LN2G, th) + vec(R_LN2B, th)
        h2 = dot(xn2, sb_ref[2]) + vec(R_B3, th)
        h2 = h2 * jax.nn.sigmoid(h2)
        h2 = dot(h2, sb_ref[3]) + vec(R_B4, th)
        x2 = h2 + x1

        # ---- final act: eval BatchNorm folded to scale/shift, then Swish ----
        xb = x2 * vec(R_BNA, th) + vec(R_BNC, th)
        xb = xb * jax.nn.sigmoid(xb)

        # ---- final Linear (block-diag over tasks), lane-dense padded output ----
        o_ref[...] = dot(xb, wout_ref[...]) + vec(R_OUTB, opad)

    return kernel


# --------------------------------------------------------------------------
# Parameter packing (done once in the wrapper; exact math reassociation only)
# --------------------------------------------------------------------------
def pack_fusion_params(extractor_params, branch_params, module_order, task_order, hidden):
    # extractors: block-diagonal Linear
    w_ext = block_diag(*[extractor_params[m][0] for m in module_order])
    b_ext = jnp.concatenate([extractor_params[m][1].reshape(1, -1) for m in module_order], 1)
    in_total, cur = w_ext.shape

    T = len(task_order)
    H = hidden
    th = T * H

    def cat1(key):
        return jnp.concatenate([branch_params[t][key].reshape(1, -1) for t in task_order], 1)

    # block 1: fold LN1 gamma/beta into fc1; concat fc1/downsample along output axis
    w1f = jnp.concatenate(
        [branch_params[t]["ln1_g"].reshape(-1, 1) * branch_params[t]["fc1_w"]
         for t in task_order], axis=1)
    b1f = jnp.concatenate(
        [branch_params[t]["fc1_b"] + branch_params[t]["ln1_b"] @ branch_params[t]["fc1_w"]
         for t in task_order], axis=1)
    dsw = jnp.concatenate([branch_params[t]["ds_w"] for t in task_order], axis=1)
    dsb = cat1("ds_b")
    w2 = block_diag(*[branch_params[t]["fc2_w"] for t in task_order])
    b2 = cat1("fc2_b")

    # block 2
    ln2g, ln2b = cat1("ln2_g"), cat1("ln2_b")
    w3 = block_diag(*[branch_params[t]["fc3_w"] for t in task_order])
    b3 = cat1("fc3_b")
    w4 = block_diag(*[branch_params[t]["fc4_w"] for t in task_order])
    b4 = cat1("fc4_b")

    # final act: fold eval-mode BN into scale/shift
    bn_a = jnp.concatenate(
        [branch_params[t]["bn_g"] * jax.lax.rsqrt(branch_params[t]["bn_v"] + EPS)
         for t in task_order], axis=1)
    bn_c = jnp.concatenate(
        [branch_params[t]["bn_b"]
         - branch_params[t]["bn_m"] * branch_params[t]["bn_g"]
         * jax.lax.rsqrt(branch_params[t]["bn_v"] + EPS)
         for t in task_order], axis=1)

    # final Linear, padded to a lane-dense output slab
    out_dims = [branch_params[t]["out_w"].shape[1] for t in task_order]
    o_total = sum(out_dims)
    opad = _round_up(o_total, LANE)
    w_out = jnp.pad(block_diag(*[branch_params[t]["out_w"] for t in task_order]),
                    ((0, 0), (0, opad - o_total)))
    out_b = jnp.pad(cat1("out_b"), ((0, 0), (0, opad - o_total)))

    # block-diag per-task averaging matrix for LayerNorm-2
    mavg = jnp.kron(jnp.eye(T, dtype=jnp.float32), jnp.ones((H, H), jnp.float32) / H)

    # pack all small (1, N) vectors into one lane-padded slab (single DMA)
    slab_w = _round_up(max(cur, th, opad), LANE)
    rows = [b_ext, b1f, dsb, b2, ln2g, ln2b, b3, b4, bn_a, bn_c, out_b]
    vecs = jnp.zeros((_round_up(len(rows), 8), slab_w), jnp.float32)
    for i, r in enumerate(rows):
        vecs = vecs.at[i, :r.shape[1]].set(r[0])

    stack_a = jnp.stack([w1f, dsw])            # [2, CUR, TH]
    stack_b = jnp.stack([mavg, w2, w3, w4])    # [4, TH, TH]

    return dict(
        w_ext=w_ext, stack_a=stack_a, stack_b=stack_b, w_out=w_out, vecs=vecs,
        cur=cur, th=th, opad=opad, in_total=in_total,
        out_dims=out_dims, task_order=tuple(task_order),
    )


# --------------------------------------------------------------------------
# FusionModel forward: one fused pallas_call, batch tiled on a "parallel" grid axis
# --------------------------------------------------------------------------
def fusion_model_forward(inputs, packed, module_order, *, batch_tile=256):
    x = jnp.concatenate([inputs[m] for m in module_order], axis=1)   # raw-input concat
    B = x.shape[0]
    tb = min(batch_tile, _round_up(B, 8))
    bpad = _round_up(B, tb)
    if bpad != B:
        x = jnp.pad(x, ((0, bpad - B), (0, 0)))
    in_total = x.shape[1]

    cur, th, opad = packed["cur"], packed["th"], packed["opad"]
    kernel = _make_fused_kernel(cur, th, opad)

    out = pl.pallas_call(
        kernel,
        grid=(pl.cdiv(bpad, tb),),
        in_specs=[
            pl.BlockSpec((tb, in_total), lambda i: (i, 0)),                # activations stream
            pl.BlockSpec(packed["w_ext"].shape, lambda i: (0, 0)),         # weights stay resident
            pl.BlockSpec(packed["stack_a"].shape, lambda i: (0, 0, 0)),
            pl.BlockSpec(packed["stack_b"].shape, lambda i: (0, 0, 0)),
            pl.BlockSpec(packed["w_out"].shape, lambda i: (0, 0)),
            pl.BlockSpec(packed["vecs"].shape, lambda i: (0, 0)),
        ],
        out_specs=pl.BlockSpec((tb, opad), lambda i: (i, 0)),
        out_shape=jax.ShapeDtypeStruct((bpad, opad), jnp.float32),
        compiler_params=pltpu.CompilerParams(dimension_semantics=("parallel",)),
    )(x, packed["w_ext"], packed["stack_a"], packed["stack_b"],
      packed["w_out"], packed["vecs"])

    # split the lane-dense output slab per task in the wrapper
    result, off = {}, 0
    for task, o in zip(packed["task_order"], packed["out_dims"]):
        result[task] = out[:B, off:off + o]
        off += o
    return result


# --------------------------------------------------------------------------
# Synthetic parameter construction (deterministic)
# --------------------------------------------------------------------------
def _linear_params(key, fan_in, fan_out):
    k_w, k_b = jax.random.split(key)
    scale = 1.0 / jnp.sqrt(jnp.float32(fan_in))
    w = jax.random.uniform(k_w, (fan_in, fan_out), jnp.float32, -scale, scale)
    b = jax.random.uniform(k_b, (1, fan_out), jnp.float32, -scale, scale)
    return w, b


def make_branch_params(key, cur_dim, hidden, num_out):
    keys = jax.random.split(key, 12)
    fc1_w, fc1_b = _linear_params(keys[0], cur_dim, hidden)
    fc2_w, fc2_b = _linear_params(keys[1], hidden, hidden)
    ds_w, ds_b = _linear_params(keys[2], cur_dim, hidden)
    fc3_w, fc3_b = _linear_params(keys[3], hidden, hidden)
    fc4_w, fc4_b = _linear_params(keys[4], hidden, hidden)
    out_w, out_b = _linear_params(keys[5], hidden, num_out)
    return {
        "ln1_g": jnp.ones((1, cur_dim), jnp.float32)
        + 0.1 * jax.random.normal(keys[6], (1, cur_dim)),
        "ln1_b": 0.1 * jax.random.normal(keys[7], (1, cur_dim)),
        "ln2_g": jnp.ones((1, hidden), jnp.float32)
        + 0.1 * jax.random.normal(keys[8], (1, hidden)),
        "ln2_b": 0.1 * jax.random.normal(keys[9], (1, hidden)),
        "fc1_w": fc1_w, "fc1_b": fc1_b,
        "fc2_w": fc2_w, "fc2_b": fc2_b,
        "ds_w": ds_w, "ds_b": ds_b,
        "fc3_w": fc3_w, "fc3_b": fc3_b,
        "fc4_w": fc4_w, "fc4_b": fc4_b,
        "bn_g": jnp.ones((1, hidden), jnp.float32)
        + 0.1 * jax.random.normal(keys[10], (1, hidden)),
        "bn_b": 0.1 * jax.random.normal(keys[11], (1, hidden)),
        "bn_m": jnp.zeros((1, hidden), jnp.float32),
        "bn_v": jnp.ones((1, hidden), jnp.float32),
        "out_w": out_w, "out_b": out_b,
    }


# --------------------------------------------------------------------------
# Pure-JAX reference of the ORIGINAL (unfused / unfolded) math
# --------------------------------------------------------------------------
def ref_branch(x, p):
    def ln(v, g, b):
        mu = jnp.mean(v, -1, keepdims=True)
        var = jnp.mean((v - mu) ** 2, -1, keepdims=True)
        return (v - mu) / jnp.sqrt(var + EPS) * g + b

    def swish(v):
        return v * jax.nn.sigmoid(v)

    h = ln(x, p["ln1_g"], p["ln1_b"])
    idn = x @ p["ds_w"] + p["ds_b"]
    h = swish(h @ p["fc1_w"] + p["fc1_b"]) @ p["fc2_w"] + p["fc2_b"]
    x1 = h + idn
    h2 = ln(x1, p["ln2_g"], p["ln2_b"])
    h2 = swish(h2 @ p["fc3_w"] + p["fc3_b"]) @ p["fc4_w"] + p["fc4_b"]
    x2 = h2 + x1
    xb = (x2 - p["bn_m"]) / jnp.sqrt(p["bn_v"] + EPS) * p["bn_g"] + p["bn_b"]
    xb = swish(xb)
    return xb @ p["out_w"] + p["out_b"]


if __name__ == "__main__":
    key = jax.random.PRNGKey(0)
    B = 8
    H = 32  # fc_task_dim
    module_dims = {"mod_a": (16, 24), "mod_b": (32, 40)}      # (in_dim, num_out_features)
    num_outputs_per_target = {"task_a": 4, "task_b": 2}
    cur_dim = sum(d[1] for d in module_dims.values())          # 64

    k_in, k_ext, k_br = jax.random.split(key, 3)

    # inputs
    in_keys = jax.random.split(k_in, len(module_dims))
    inputs = {
        name: jax.random.normal(in_keys[i], (B, dims[0]), jnp.float32)
        for i, (name, dims) in enumerate(module_dims.items())
    }

    # feature-extractor params (modules_to_fuse, synthetic Linear)
    ext_keys = jax.random.split(k_ext, len(module_dims))
    extractor_params = {
        name: _linear_params(ext_keys[i], dims[0], dims[1])
        for i, (name, dims) in enumerate(module_dims.items())
    }

    # per-task branch params (2 MLP residual blocks + BN + final linear)
    br_keys = jax.random.split(k_br, len(num_outputs_per_target))
    branch_params = {
        task: make_branch_params(br_keys[i], cur_dim, H, n_out)
        for i, (task, n_out) in enumerate(num_outputs_per_target.items())
    }

    module_order = tuple(module_dims.keys())
    task_order = tuple(num_outputs_per_target.keys())
    packed = pack_fusion_params(extractor_params, branch_params,
                                module_order, task_order, hidden=H)

    out = fusion_model_forward(inputs, packed, module_order)
    out = jax.tree_util.tree_map(jax.block_until_ready, out)

    # correctness check against pure-JAX reference of the original math
    feats_ref = [inputs[n] @ extractor_params[n][0] + extractor_params[n][1]
                 for n in module_order]
    fused_ref = jnp.concatenate(feats_ref, axis=1)
    for task in task_order:
        expected = ref_branch(fused_ref, branch_params[task])
        assert out[task].shape == (B, num_outputs_per_target[task])
        assert jnp.allclose(out[task], expected, atol=5e-4, rtol=5e-4), task

    print("KERNEL_OK")
</pallas_src>

<mosaic_0001>
module attributes {stable_mosaic.version = 11 : i64} {
  func.func @kernel(%arg0: i32, %arg1: memref<8x48xf32, #tpu.memory_space<vmem>>, %arg2: memref<48x64xf32, #tpu.memory_space<vmem>>, %arg3: memref<2x64x64xf32, #tpu.memory_space<vmem>>, %arg4: memref<4x64x64xf32, #tpu.memory_space<vmem>>, %arg5: memref<64x128xf32, #tpu.memory_space<vmem>>, %arg6: memref<16x128xf32, #tpu.memory_space<vmem>>, %arg7: memref<8x128xf32, #tpu.memory_space<vmem>>) attributes {dimension_semantics = [#tpu.dimension_semantics<parallel>], iteration_bounds = array<i64: 1>, scalar_prefetch = 0 : i64, scratch_operands = 0 : i64, tpu.core_type = #tpu.core_type<tc>, window_params = [{transform_indices = @transform_0, window_bounds = array<i64: 8, 48>}, {pipeline_mode = #tpu.pipeline_mode<synchronous>, transform_indices = @transform_1, window_bounds = array<i64: 48, 64>}, {pipeline_mode = #tpu.pipeline_mode<synchronous>, transform_indices = @transform_2, window_bounds = array<i64: 2, 64, 64>}, {pipeline_mode = #tpu.pipeline_mode<synchronous>, transform_indices = @transform_3, window_bounds = array<i64: 4, 64, 64>}, {pipeline_mode = #tpu.pipeline_mode<synchronous>, transform_indices = @transform_4, window_bounds = array<i64: 64, 128>}, {pipeline_mode = #tpu.pipeline_mode<synchronous>, transform_indices = @transform_5, window_bounds = array<i64: 16, 128>}, {transform_indices = @transform_6, window_bounds = array<i64: 8, 128>}]} {
    %c0 = arith.constant 0 : index
    %c0_0 = arith.constant 0 : index
    %0 = vector.load %arg1[%c0, %c0_0] : memref<8x48xf32, #tpu.memory_space<vmem>>, vector<8x48xf32>
    %c0_1 = arith.constant 0 : index
    %c0_2 = arith.constant 0 : index
    %1 = vector.load %arg6[%c0_1, %c0_2] : memref<16x128xf32, #tpu.memory_space<vmem>>, vector<16x128xf32>
    %c0_3 = arith.constant 0 : index
    %c0_4 = arith.constant 0 : index
    %2 = vector.load %arg2[%c0_3, %c0_4] : memref<48x64xf32, #tpu.memory_space<vmem>>, vector<48x64xf32>
    %cst = arith.constant dense<0.000000e+00> : vector<8x64xf32>
    %3 = tpu.matmul %0, %2, %cst {dimension_numbers = #tpu.dot_dimension_numbers<[1], [0], [0], [1], [0, 0, 1, 1], [], []>} : vector<8x48xf32>, vector<48x64xf32>, vector<8x64xf32> -> vector<8x64xf32>
    %4 = vector.extract_strided_slice %1 {offsets = [0, 0], sizes = [1, 64], strides = [1, 1]} : vector<16x128xf32> to vector<1x64xf32>
    %5 = vector.broadcast %4 : vector<1x64xf32> to vector<8x64xf32>
    %6 = arith.addf %3, %5 : vector<8x64xf32>
    %cst_5 = arith.constant dense<0.000000e+00> : vector<8xf32>
    %7 = vector.multi_reduction <add>, %6, %cst_5 [1] : vector<8x64xf32> to vector<8xf32>
    %8 = vector.shape_cast %7 : vector<8xf32> to vector<8x1xf32>
    %cst_6 = arith.constant 6.400000e+01 : f32
    %9 = vector.broadcast %cst_6 : f32 to vector<8x1xf32>
    %10 = arith.divf %8, %9 : vector<8x1xf32>
    %11 = vector.broadcast %10 : vector<8x1xf32> to vector<8x64xf32>
    %12 = arith.subf %6, %11 : vector<8x64xf32>
    %13 = arith.mulf %12, %12 : vector<8x64xf32>
    %cst_7 = arith.constant dense<0.000000e+00> : vector<8xf32>
    %14 = vector.multi_reduction <add>, %13, %cst_7 [1] : vector<8x64xf32> to vector<8xf32>
    %15 = vector.shape_cast %14 : vector<8xf32> to vector<8x1xf32>
    %cst_8 = arith.constant 6.400000e+01 : f32
    %16 = vector.broadcast %cst_8 : f32 to vector<8x1xf32>
    %17 = arith.divf %15, %16 : vector<8x1xf32>
    %18 = vector.broadcast %10 : vector<8x1xf32> to vector<8x64xf32>
    %19 = arith.subf %6, %18 : vector<8x64xf32>
    %cst_9 = arith.constant 9.99999974E-6 : f32
    %20 = vector.broadcast %cst_9 : f32 to vector<8x1xf32>
    %21 = arith.addf %17, %20 : vector<8x1xf32>
    %22 = math.rsqrt %21 : vector<8x1xf32>
    %23 = vector.broadcast %22 : vector<8x1xf32> to vector<8x64xf32>
    %24 = arith.mulf %19, %23 : vector<8x64xf32>
    %c1 = arith.constant 1 : index
    %c0_10 = arith.constant 0 : index
    %c0_11 = arith.constant 0 : index
    %25 = vector.load %arg3[%c1, %c0_10, %c0_11] : memref<2x64x64xf32, #tpu.memory_space<vmem>>, vector<1x64x64xf32>
    %26 = vector.shape_cast %25 : vector<1x64x64xf32> to vector<64x64xf32>
    %cst_12 = arith.constant dense<0.000000e+00> : vector<8x64xf32>
    %27 = tpu.matmul %6, %26, %cst_12 {dimension_numbers = #tpu.dot_dimension_numbers<[1], [0], [0], [1], [0, 0, 1, 1], [], []>} : vector<8x64xf32>, vector<64x64xf32>, vector<8x64xf32> -> vector<8x64xf32>
    %28 = vector.extract_strided_slice %1 {offsets = [2, 0], sizes = [1, 64], strides = [1, 1]} : vector<16x128xf32> to vector<1x64xf32>
    %29 = vector.broadcast %28 : vector<1x64xf32> to vector<8x64xf32>
    %30 = arith.addf %27, %29 : vector<8x64xf32>
    %c0_13 = arith.constant 0 : index
    %c0_14 = arith.constant 0 : index
    %c0_15 = arith.constant 0 : index
    %31 = vector.load %arg3[%c0_13, %c0_14, %c0_15] : memref<2x64x64xf32, #tpu.memory_space<vmem>>, vector<1x64x64xf32>
    %32 = vector.shape_cast %31 : vector<1x64x64xf32> to vector<64x64xf32>
    %cst_16 = arith.constant dense<0.000000e+00> : vector<8x64xf32>
    %33 = tpu.matmul %24, %32, %cst_16 {dimension_numbers = #tpu.dot_dimension_numbers<[1], [0], [0], [1], [0, 0, 1, 1], [], []>} : vector<8x64xf32>, vector<64x64xf32>, vector<8x64xf32> -> vector<8x64xf32>
    %34 = vector.extract_strided_slice %1 {offsets = [1, 0], sizes = [1, 64], strides = [1, 1]} : vector<16x128xf32> to vector<1x64xf32>
    %35 = vector.broadcast %34 : vector<1x64xf32> to vector<8x64xf32>
    %36 = arith.addf %33, %35 : vector<8x64xf32>
    %37 = arith.negf %36 : vector<8x64xf32>
    %38 = math.exp %37 : vector<8x64xf32>
    %cst_17 = arith.constant 1.000000e+00 : f32
    %39 = vector.broadcast %cst_17 : f32 to vector<8x64xf32>
    %40 = arith.addf %39, %38 : vector<8x64xf32>
    %41 = arith.divf %39, %40 : vector<8x64xf32>
    %42 = arith.mulf %36, %41 : vector<8x64xf32>
    %c1_18 = arith.constant 1 : index
    %c0_19 = arith.constant 0 : index
    %c0_20 = arith.constant 0 : index
    %43 = vector.load %arg4[%c1_18, %c0_19, %c0_20] : memref<4x64x64xf32, #tpu.memory_space<vmem>>, vector<1x64x64xf32>
    %44 = vector.shape_cast %43 : vector<1x64x64xf32> to vector<64x64xf32>
    %cst_21 = arith.constant dense<0.000000e+00> : vector<8x64xf32>
    %45 = tpu.matmul %42, %44, %cst_21 {dimension_numbers = #tpu.dot_dimension_numbers<[1], [0], [0], [1], [0, 0, 1, 1], [], []>} : vector<8x64xf32>, vector<64x64xf32>, vector<8x64xf32> -> vector<8x64xf32>
    %46 = vector.extract_strided_slice %1 {offsets = [3, 0], sizes = [1, 64], strides = [1, 1]} : vector<16x128xf32> to vector<1x64xf32>
    %47 = vector.broadcast %46 : vector<1x64xf32> to vector<8x64xf32>
    %48 = arith.addf %45, %47 : vector<8x64xf32>
    %49 = arith.addf %48, %30 : vector<8x64xf32>
    %c0_22 = arith.constant 0 : index
    %c0_23 = arith.constant 0 : index
    %c0_24 = arith.constant 0 : index
    %50 = vector.load %arg4[%c0_22, %c0_23, %c0_24] : memref<4x64x64xf32, #tpu.memory_space<vmem>>, vector<1x64x64xf32>
    %51 = vector.shape_cast %50 : vector<1x64x64xf32> to vector<64x64xf32>
    %cst_25 = arith.constant dense<0.000000e+00> : vector<8x64xf32>
    %52 = tpu.matmul %49, %51, %cst_25 {dimension_numbers = #tpu.dot_dimension_numbers<[1], [0], [0], [1], [0, 0, 1, 1], [], []>} : vector<8x64xf32>, vector<64x64xf32>, vector<8x64xf32> -> vector<8x64xf32>
    %53 = arith.subf %49, %52 : vector<8x64xf32>
    %54 = arith.mulf %53, %53 : vector<8x64xf32>
    %cst_26 = arith.constant dense<0.000000e+00> : vector<8x64xf32>
    %55 = tpu.matmul %54, %51, %cst_26 {dimension_numbers = #tpu.dot_dimension_numbers<[1], [0], [0], [1], [0, 0, 1, 1], [], []>} : vector<8x64xf32>, vector<64x64xf32>, vector<8x64xf32> -> vector<8x64xf32>
    %cst_27 = arith.constant 9.99999974E-6 : f32
    %56 = vector.broadcast %cst_27 : f32 to vector<8x64xf32>
    %57 = arith.addf %55, %56 : vector<8x64xf32>
    %58 = math.rsqrt %57 : vector<8x64xf32>
    %59 = arith.mulf %53, %58 : vector<8x64xf32>
    %60 = vector.extract_strided_slice %1 {offsets = [4, 0], sizes = [1, 64], strides = [1, 1]} : vector<16x128xf32> to vector<1x64xf32>
    %61 = vector.broadcast %60 : vector<1x64xf32> to vector<8x64xf32>
    %62 = arith.mulf %59, %61 : vector<8x64xf32>
    %63 = vector.extract_strided_slice %1 {offsets = [5, 0], sizes = [1, 64], strides = [1, 1]} : vector<16x128xf32> to vector<1x64xf32>
    %64 = vector.broadcast %63 : vector<1x64xf32> to vector<8x64xf32>
    %65 = arith.addf %62, %64 : vector<8x64xf32>
    %c2 = arith.constant 2 : index
    %c0_28 = arith.constant 0 : index
    %c0_29 = arith.constant 0 : index
    %66 = vector.load %arg4[%c2, %c0_28, %c0_29] : memref<4x64x64xf32, #tpu.memory_space<vmem>>, vector<1x64x64xf32>
    %67 = vector.shape_cast %66 : vector<1x64x64xf32> to vector<64x64xf32>
    %cst_30 = arith.constant dense<0.000000e+00> : vector<8x64xf32>
    %68 = tpu.matmul %65, %67, %cst_30 {dimension_numbers = #tpu.dot_dimension_numbers<[1], [0], [0], [1], [0, 0, 1, 1], [], []>} : vector<8x64xf32>, vector<64x64xf32>, vector<8x64xf32> -> vector<8x64xf32>
    %69 = vector.extract_strided_slice %1 {offsets = [6, 0], sizes = [1, 64], strides = [1, 1]} : vector<16x128xf32> to vector<1x64xf32>
    %70 = vector.broadcast %69 : vector<1x64xf32> to vector<8x64xf32>
    %71 = arith.addf %68, %70 : vector<8x64xf32>
    %72 = arith.negf %71 : vector<8x64xf32>
    %73 = math.exp %72 : vector<8x64xf32>
    %cst_31 = arith.constant 1.000000e+00 : f32
    %74 = vector.broadcast %cst_31 : f32 to vector<8x64xf32>
    %75 = arith.addf %74, %73 : vector<8x64xf32>
    %76 = arith.divf %74, %75 : vector<8x64xf32>
    %77 = arith.mulf %71, %76 : vector<8x64xf32>
    %c3 = arith.constant 3 : index
    %c0_32 = arith.constant 0 : index
    %c0_33 = arith.constant 0 : index
    %78 = vector.load %arg4[%c3, %c0_32, %c0_33] : memref<4x64x64xf32, #tpu.memory_space<vmem>>, vector<1x64x64xf32>
    %79 = vector.shape_cast %78 : vector<1x64x64xf32> to vector<64x64xf32>
    %cst_34 = arith.constant dense<0.000000e+00> : vector<8x64xf32>
    %80 = tpu.matmul %77, %79, %cst_34 {dimension_numbers = #tpu.dot_dimension_numbers<[1], [0], [0], [1], [0, 0, 1, 1], [], []>} : vector<8x64xf32>, vector<64x64xf32>, vector<8x64xf32> -> vector<8x64xf32>
    %81 = vector.extract_strided_slice %1 {offsets = [7, 0], sizes = [1, 64], strides = [1, 1]} : vector<16x128xf32> to vector<1x64xf32>
    %82 = vector.broadcast %81 : vector<1x64xf32> to vector<8x64xf32>
    %83 = arith.addf %80, %82 : vector<8x64xf32>
    %84 = arith.addf %83, %49 : vector<8x64xf32>
    %85 = vector.extract_strided_slice %1 {offsets = [8, 0], sizes = [1, 64], strides = [1, 1]} : vector<16x128xf32> to vector<1x64xf32>
    %86 = vector.broadcast %85 : vector<1x64xf32> to vector<8x64xf32>
    %87 = arith.mulf %84, %86 : vector<8x64xf32>
    %88 = vector.extract_strided_slice %1 {offsets = [9, 0], sizes = [1, 64], strides = [1, 1]} : vector<16x128xf32> to vector<1x64xf32>
    %89 = vector.broadcast %88 : vector<1x64xf32> to vector<8x64xf32>
    %90 = arith.addf %87, %89 : vector<8x64xf32>
    %91 = arith.negf %90 : vector<8x64xf32>
    %92 = math.exp %91 : vector<8x64xf32>
    %cst_35 = arith.constant 1.000000e+00 : f32
    %93 = vector.broadcast %cst_35 : f32 to vector<8x64xf32>
    %94 = arith.addf %93, %92 : vector<8x64xf32>
    %95 = arith.divf %93, %94 : vector<8x64xf32>
    %96 = arith.mulf %90, %95 : vector<8x64xf32>
    %c0_36 = arith.constant 0 : index
    %c0_37 = arith.constant 0 : index
    %97 = vector.load %arg5[%c0_36, %c0_37] : memref<64x128xf32, #tpu.memory_space<vmem>>, vector<64x128xf32>
    %cst_38 = arith.constant dense<0.000000e+00> : vector<8x128xf32>
    %98 = tpu.matmul %96, %97, %cst_38 {dimension_numbers = #tpu.dot_dimension_numbers<[1], [0], [0], [1], [0, 0, 1, 1], [], []>} : vector<8x64xf32>, vector<64x128xf32>, vector<8x128xf32> -> vector<8x128xf32>
    %99 = vector.extract_strided_slice %1 {offsets = [10, 0], sizes = [1, 128], strides = [1, 1]} : vector<16x128xf32> to vector<1x128xf32>
    %100 = vector.broadcast %99 : vector<1x128xf32> to vector<8x128xf32>
    %101 = arith.addf %98, %100 : vector<8x128xf32>
    %c0_39 = arith.constant 0 : index
    %c0_40 = arith.constant 0 : index
    %102 = vector.load %arg7[%c0_39, %c0_40] : memref<8x128xf32, #tpu.memory_space<vmem>>, vector<8x128xf32>
    tpu.vector_store %arg7[%c0_39, %c0_40], %101 {strides = array<i32>} : memref<8x128xf32, #tpu.memory_space<vmem>>, vector<8x128xf32>,
    return
  }
  func.func @transform_0(%arg0: i32) -> (i32, i32) {
    %c0_i32 = arith.constant 0 : i32
    %c0_i32_0 = arith.constant 0 : i32
    return %arg0, %c0_i32 : i32, i32
  }
  func.func @transform_1(%arg0: i32) -> (i32, i32) {
    %c0_i32 = arith.constant 0 : i32
    %c0_i32_0 = arith.constant 0 : i32
    %c0_i32_1 = arith.constant 0 : i32
    return %c0_i32, %c0_i32_0 : i32, i32
  }
  func.func @transform_2(%arg0: i32) -> (i32, i32, i32) {
    %c0_i32 = arith.constant 0 : i32
    %c0_i32_0 = arith.constant 0 : i32
    %c0_i32_1 = arith.constant 0 : i32
    %c0_i32_2 = arith.constant 0 : i32
    return %c0_i32, %c0_i32_0, %c0_i32_1 : i32, i32, i32
  }
  func.func @transform_3(%arg0: i32) -> (i32, i32, i32) {
    %c0_i32 = arith.constant 0 : i32
    %c0_i32_0 = arith.constant 0 : i32
    %c0_i32_1 = arith.constant 0 : i32
    %c0_i32_2 = arith.constant 0 : i32
    return %c0_i32, %c0_i32_0, %c0_i32_1 : i32, i32, i32
  }
  func.func @transform_4(%arg0: i32) -> (i32, i32) {
    %c0_i32 = arith.constant 0 : i32
    %c0_i32_0 = arith.constant 0 : i32
    %c0_i32_1 = arith.constant 0 : i32
    return %c0_i32, %c0_i32_0 : i32, i32
  }
  func.func @transform_5(%arg0: i32) -> (i32, i32) {
    %c0_i32 = arith.constant 0 : i32
    %c0_i32_0 = arith.constant 0 : i32
    %c0_i32_1 = arith.constant 0 : i32
    return %c0_i32, %c0_i32_0 : i32, i32
  }
  func.func @transform_6(%arg0: i32) -> (i32, i32) {
    %c0_i32 = arith.constant 0 : i32
    %c0_i32_0 = arith.constant 0 : i32
    return %arg0, %c0_i32 : i32, i32
  }
}

</mosaic_0001>

<llo_original>
// kernel: tpu_custom_call.1
$region0: #{tpu_custom_call.1}
  #allocation0 [shape = 'u32[]', space=smem, size = 0x4, offset = 0x4, fixed_abs, tag = 'smem constant byte address 0x4 - core index']
  #allocation1 [shape = 'u32[144,128]{1,0:T(1,128)}', space=vmem, size = 0x12000, scoped, tag = 'internal scratch']
  %s0 = inlined_call_operand.hbm [shape: f32[8,48], index: 0, kind: input, shape index: {}]
  %s1 = inlined_call_operand.hbm [shape: f32[48,64], index: 1, kind: input, shape index: {}]
  %s2 = inlined_call_operand.hbm [shape: f32[2,64,64], index: 2, kind: input, shape index: {}]
  %s3 = inlined_call_operand.hbm [shape: f32[4,64,64], index: 3, kind: input, shape index: {}]
  %s4 = inlined_call_operand.hbm [shape: f32[64,128], index: 4, kind: input, shape index: {}]
  %s5 = inlined_call_operand.hbm [shape: f32[16,128], index: 5, kind: input, shape index: {}]
  %s6 = inlined_call_operand.hbm [shape: f32[8,128], index: 6, kind: output, shape index: {}]
  %s7 = sld [smem:[#allocation0]]
  $region58: #{tpu_custom_call.1} parent=0
    _
  %s9 = ssub.s32 1, %s7
  %s10 = scalar_select 0, %s9, %s7
  $region1: #{tpu_custom_call.1} parent=0
    #allocation2 [shape = 'u8[4096]{0}', space=vmem, size = 0x1000, scoped, tag = 'input window, operand 0, single buffered']
    #allocation3 [shape = 's32[1]{0}', space=sflag, size = 0x4, scoped, tag = 'scoped memory for tpu_custom_call.1']
    #allocation4 [shape = 's32[1]{0}', space=sflag, size = 0x4, scoped, tag = 'scoped memory for tpu_custom_call.1']
    #allocation5 [shape = 'u8[24576]{0}', space=vmem, size = 0x6000, scoped, tag = 'input window, operand 1, single buffered']
    #allocation6 [shape = 's32[1]{0}', space=sflag, size = 0x4, scoped, tag = 'scoped memory for tpu_custom_call.1']
    #allocation7 [shape = 'u8[65536]{0}', space=vmem, size = 0x10000, scoped, tag = 'input window, operand 2, single buffered']
    #allocation8 [shape = 'u8[131072]{0}', space=vmem, size = 0x20000, scoped, tag = 'input window, operand 3, single buffered']
    #allocation9 [shape = 's32[1]{0}', space=sflag, size = 0x4, scoped, tag = 'scoped memory for tpu_custom_call.1']
    #allocation10 [shape = 'u8[32768]{0}', space=vmem, size = 0x8000, scoped, tag = 'input window, operand 4, single buffered']
    #allocation11 [shape = 'u8[8192]{0}', space=vmem, size = 0x2000, scoped, tag = 'input window, operand 5, single buffered']
    #allocation12 [shape = 's32[1]{0}', space=sflag, size = 0x4, scoped, tag = 'scoped memory for tpu_custom_call.1']
    #allocation13 [shape = 'u8[4096]{0}', space=vmem, size = 0x1000, scoped, tag = 'output window, operand 0, single buffered']
    %11 = vsyncpa [#allocation3], 0
    %12 = vsyncpa [#allocation6], 0
    %13 = vsyncpa [#allocation9], 0
    %14 = vsyncpa [#allocation12], 0
    %15 = vsyncpa [#allocation4], 0
    // Predicated region
    $region2: #{tpu_custom_call.1} parent=1 // pred_check
      _
    $region3: #{tpu_custom_call.1} parent=1 // pred_check_branch
      %17 = sbr.rel (0) target = $region5
    $region4: #{tpu_custom_call.1} parent=1 // pred_region
      %s19 = ssub.s32 128, 128
      %20 = vsyncadd [#allocation3], %s19
      %s22 = sshll.u32 [#allocation2], 4
      %s23 = int_to_ptr.vmem [resolvable:$true] %s22
      %25 = dma.hbm_to_vmem [thread:$0]  %s0, 128, %s23, [#allocation3]
    $region5: #{tpu_custom_call.1} parent=1 // pred_fallthru
      _
    // Predicated region
    $region6: #{tpu_custom_call.1} parent=1 // pred_check
      _
    $region7: #{tpu_custom_call.1} parent=1 // pred_check_branch
      %27 = sbr.rel (0) target = $region9
    $region8: #{tpu_custom_call.1} parent=1 // pred_region
      %s29 = ssub.s32 768, 768
      %30 = vsyncadd [#allocation6], %s29
      %s31 = sshll.u32 [#allocation5], 4
      %s32 = int_to_ptr.vmem [resolvable:$true] %s31
      %37 = dma.hbm_to_vmem [thread:$0]  %s1, 768, %s32, [#allocation6], 128, 128, 8
    $region9: #{tpu_custom_call.1} parent=1 // pred_fallthru
      _
    // Predicated region
    $region10: #{tpu_custom_call.1} parent=1 // pred_check
      _
    $region11: #{tpu_custom_call.1} parent=1 // pred_check_branch
      %39 = sbr.rel (0) target = $region13
    $region12: #{tpu_custom_call.1} parent=1 // pred_region
      %s41 = ssub.s32 2048, 2048
      %42 = vsyncadd [#allocation6], %s41
      %s43 = sshll.u32 [#allocation7], 4
      %s44 = int_to_ptr.vmem [resolvable:$true] %s43
      %49 = dma.hbm_to_vmem [thread:$0]  %s2, 2048, %s44, [#allocation6], 128, 128, 8
    $region13: #{tpu_custom_call.1} parent=1 // pred_fallthru
      _
    // Predicated region
    $region14: #{tpu_custom_call.1} parent=1 // pred_check
      _
    $region15: #{tpu_custom_call.1} parent=1 // pred_check_branch
      %51 = sbr.rel (0) target = $region17
    $region16: #{tpu_custom_call.1} parent=1 // pred_region
      %s53 = ssub.s32 4096, 4096
      %54 = vsyncadd [#allocation9], %s53
      %s55 = sshll.u32 [#allocation8], 4
      %s56 = int_to_ptr.vmem [resolvable:$true] %s55
      %61 = dma.hbm_to_vmem [thread:$0]  %s3, 4096, %s56, [#allocation9], 128, 128, 8
    $region17: #{tpu_custom_call.1} parent=1 // pred_fallthru
      _
    // Predicated region
    $region18: #{tpu_custom_call.1} parent=1 // pred_check
      _
    $region19: #{tpu_custom_call.1} parent=1 // pred_check_branch
      %63 = sbr.rel (0) target = $region21
    $region20: #{tpu_custom_call.1} parent=1 // pred_region
      %s65 = ssub.s32 1024, 1024
      %66 = vsyncadd [#allocation9], %s65
      %s67 = sshll.u32 [#allocation10], 4
      %s68 = int_to_ptr.vmem [resolvable:$true] %s67
      %73 = dma.hbm_to_vmem [thread:$0]  %s4, 1024, %s68, [#allocation9], 128, 128, 8
    $region21: #{tpu_custom_call.1} parent=1 // pred_fallthru
      _
    // Predicated region
    $region22: #{tpu_custom_call.1} parent=1 // pred_check
      _
    $region23: #{tpu_custom_call.1} parent=1 // pred_check_branch
      %75 = sbr.rel (0) target = $region25
    $region24: #{tpu_custom_call.1} parent=1 // pred_region
      %s77 = ssub.s32 256, 256
      %78 = vsyncadd [#allocation12], %s77
      %s79 = sshll.u32 [#allocation11], 4
      %s80 = int_to_ptr.vmem [resolvable:$true] %s79
      %85 = dma.hbm_to_vmem [thread:$0]  %s5, 256, %s80, [#allocation12], 128, 128, 8
    $region25: #{tpu_custom_call.1} parent=1 // pred_fallthru
      _
    // Predicated region
    $region26: #{tpu_custom_call.1} parent=1 // pred_check
      _
    $region27: #{tpu_custom_call.1} parent=1 // pred_check_branch
      %87 = sbr.rel (0) target = $region29
    $region28: #{tpu_custom_call.1} parent=1 // pred_region
      %88 = dma.done [#allocation3], 128
    $region29: #{tpu_custom_call.1} parent=1 // pred_fallthru
      _
    // Predicated region
    $region30: #{tpu_custom_call.1} parent=1 // pred_check
      _
    $region31: #{tpu_custom_call.1} parent=1 // pred_check_branch
      %90 = sbr.rel (0) target = $region33
    $region32: #{tpu_custom_call.1} parent=1 // pred_region
      %91 = dma.done [#allocation6], 768
    $region33: #{tpu_custom_call.1} parent=1 // pred_fallthru
      _
    // Predicated region
    $region34: #{tpu_custom_call.1} parent=1 // pred_check
      _
    $region35: #{tpu_custom_call.1} parent=1 // pred_check_branch
      %93 = sbr.rel (0) target = $region37
    $region36: #{tpu_custom_call.1} parent=1 // pred_region
      %94 = dma.done [#allocation6], 2048
    $region37: #{tpu_custom_call.1} parent=1 // pred_fallthru
      _
    // Predicated region
    $region38: #{tpu_custom_call.1} parent=1 // pred_check
      _
    $region39: #{tpu_custom_call.1} parent=1 // pred_check_branch
      %96 = sbr.rel (0) target = $region41
    $region40: #{tpu_custom_call.1} parent=1 // pred_region
      %97 = dma.done [#allocation9], 4096
    $region41: #{tpu_custom_call.1} parent=1 // pred_fallthru
      _
    // Predicated region
    $region42: #{tpu_custom_call.1} parent=1 // pred_check
      _
    $region43: #{tpu_custom_call.1} parent=1 // pred_check_branch
      %99 = sbr.rel (0) target = $region45
    $region44: #{tpu_custom_call.1} parent=1 // pred_region
      %100 = dma.done [#allocation9], 1024
    $region45: #{tpu_custom_call.1} parent=1 // pred_fallthru
      _
    // Predicated region
    $region46: #{tpu_custom_call.1} parent=1 // pred_check
      _
    $region47: #{tpu_custom_call.1} parent=1 // pred_check_branch
      %102 = sbr.rel (0) target = $region49
    $region48: #{tpu_custom_call.1} parent=1 // pred_region
      %103 = dma.done [#allocation12], 256
    $region49: #{tpu_custom_call.1} parent=1 // pred_fallthru
      _
    %v104 = vld [vmem:[#allocation2] sm:$0xff]
    %v105 = vld [vmem:[#allocation11] sm:$0xff]
    %v106 = vld [vmem:[#allocation11 + $0x8] sm:$0xff]
    %v107 = vld [vmem:[#allocation5] sm:$0xff]
    %v108 = vld [vmem:[#allocation5 + $0x8] sm:$0xff]
    %v109 = vld [vmem:[#allocation5 + $0x10] sm:$0xff]
    %v110 = vld [vmem:[#allocation5 + $0x18] sm:$0xff]
    %v111 = vld [vmem:[#allocation5 + $0x20] sm:$0xff]
    %v112 = vld [vmem:[#allocation5 + $0x28] sm:$0xff]
    %v113 = vlaneseq
    %v114 = vshrl.u32 %v113, 7
    %v115 = vsub.s32 0, %v114
    %v116 = vrot.slane %v105, %v115
    %vm117 = vcmask 392192
    %v119 = vsel %vm117, %v104, 0
    %121 = vmatprep.subr.mxu0 0.0
    %122 = vmatpush1.msra.mxu0 0.0
    %123 = vmatprep.subr.mxu0 0.0
    %124 = vmatpush1.msra.mxu0 0.0
    %125 = vmatprep.subr.mxu0 0.0
    %126 = vmatpush1.msra.mxu0 0.0
    %127 = vmatprep.subr.mxu0 0.0
    %128 = vmatpush1.msra.mxu0 0.0
    %129 = vmatprep.subr.mxu0 0.0
    %130 = vmatpush1.msra.mxu0 0.0
    %131 = vmatprep.subr.mxu0 0.0
    %132 = vmatpush1.msra.mxu0 0.0
    %133 = vmatprep.subr.mxu0 0.0
    %134 = vmatpush1.msra.mxu0 0.0
    %135 = vmatprep.subr.mxu0 0.0
    %136 = vmatpush1.msra.mxu0 0.0
    %137 = vmatprep.subr.mxu0 0.0
    %138 = vmatpush1.msra.mxu0 0.0
    %139 = vmatprep.subr.mxu0 0.0
    %140 = vmatpush1.msra.mxu0 0.0
    %141 = vmatprep.subr.mxu0 0.0
    %142 = vmatpush1.msra.mxu0 %v112
    %143 = vmatprep.subr.mxu0 0.0
    %144 = vmatpush1.msra.mxu0 %v111
    %145 = vmatprep.subr.mxu0 0.0
    %146 = vmatpush1.msra.mxu0 %v110
    %147 = vmatprep.subr.mxu0 0.0
    %148 = vmatpush1.msra.mxu0 %v109
    %149 = vmatprep.subr.mxu0 0.0
    %150 = vmatpush1.msra.mxu0 %v108
    %151 = vmatprep.subr.mxu0 0.0
    %152 = vmatpush1.msra.mxu0 %v107
    %153 = vmatprep.subr.mxu0 0.0
    %154 = vmatpush2.msra.mxu0 0.0
    %155 = vmatprep.subr.mxu0 0.0
    %156 = vmatpush2.msra.mxu0 0.0
    %157 = vmatprep.subr.mxu0 0.0
    %158 = vmatpush2.msra.mxu0 0.0
    %159 = vmatprep.subr.mxu0 0.0
    %160 = vmatpush2.msra.mxu0 0.0
    %161 = vmatprep.subr.mxu0 0.0
    %162 = vmatpush2.msra.mxu0 0.0
    %163 = vmatprep.subr.mxu0 0.0
    %164 = vmatpush2.msra.mxu0 0.0
    %165 = vmatprep.subr.mxu0 0.0
    %166 = vmatpush2.msra.mxu0 0.0
    %167 = vmatprep.subr.mxu0 0.0
    %168 = vmatpush2.msra.mxu0 0.0
    %169 = vmatprep.subr.mxu0 0.0
    %170 = vmatpush2.msra.mxu0 0.0
    %171 = vmatprep.subr.mxu0 0.0
    %172 = vmatpush2.msra.mxu0 0.0
    %173 = vmatprep.subr.mxu0 0.0
    %174 = vmatpush2.msra.mxu0 0.0
    %175 = vmatprep.subr.mxu0 0.0
    %176 = vmatpush2.msra.mxu0 0.0
    %177 = vmatprep.subr.mxu0 0.0
    %178 = vmatpush2.msra.mxu0 0.0
    %179 = vmatprep.subr.mxu0 0.0
    %180 = vmatpush2.msra.mxu0 0.0
    %181 = vmatprep.subr.mxu0 0.0
    %182 = vmatpush2.msra.mxu0 0.0
    %183 = vmatprep.subr.mxu0 0.0
    %184 = vmatpush2.msra.mxu0 0.0
    %185 = vmatprep.mubr.f32.mxu0 0.0
    %186 = vmatmul.mubr.f32.gmra.mxu0 %v119
    %v187 = vpop.f32.mrf.mxu0
    %v188 = vadd.f32 %v116, %v187
    %v189 = vpop.f32.mrf.mxu0
    %190 = vdwg.mxu0
    %vm191 = vcmask 523264
    %v192 = vsel %vm191, %v188, 0.0
    %193 = vadd.xlane.f32.xlu0 %v192
    %v194 = vpop.xlane.xlu0 %193
    %v195 = vrcp.pop 64.0
    %v196 = vmul.f32 %v194, %v195
    %v197 = vsub.f32 %v188, %v196
    %v198 = vmul.f32 %v197, %v197
    %v199 = vsel %vm191, %v198, 0.0
    %200 = vadd.xlane.f32.xlu0 %v199
    %v201 = vpop.xlane.xlu0 %200
    %v202 = vmul.f32 %v201, %v195
    %v203 = vadd.f32 %v202, 1e-05
    %v204 = vrsqrt.pop %v203
    %v205 = vmul.f32 %v197, %v204
    %s206 = scalar_lea.vmem [#allocation7], 64
    %v207 = vld [vmem:[%s206] sm:$0xff]
    %v208 = vld [vmem:[%s206 + $0x8] sm:$0xff]
    %v209 = vld [vmem:[%s206 + $0x10] sm:$0xff]
    %v210 = vld [vmem:[%s206 + $0x18] sm:$0xff]
    %v211 = vld [vmem:[%s206 + $0x20] sm:$0xff]
    %v212 = vld [vmem:[%s206 + $0x28] sm:$0xff]
    %v213 = vld [vmem:[%s206 + $0x30] sm:$0xff]
    %v214 = vld [vmem:[%s206 + $0x38] sm:$0xff]
    %v215 = vlaneseq
    %v216 = vshrl.u32 %v215, 7
    %v217 = vsub.s32 2, %v216
    %v218 = vrot.slane %v105, %v217
    %v220 = vsel %vm191, %v188, 0
    %222 = vmatprep.subr.mxu0 0.0
    %223 = vmatpush1.msra.mxu0 0.0
    %224 = vmatprep.subr.mxu0 0.0
    %225 = vmatpush1.msra.mxu0 0.0
    %226 = vmatprep.subr.mxu0 0.0
    %227 = vmatpush1.msra.mxu0 0.0
    %228 = vmatprep.subr.mxu0 0.0
    %229 = vmatpush1.msra.mxu0 0.0
    %230 = vmatprep.subr.mxu0 0.0
    %231 = vmatpush1.msra.mxu0 0.0
    %232 = vmatprep.subr.mxu0 0.0
    %233 = vmatpush1.msra.mxu0 0.0
    %234 = vmatprep.subr.mxu0 0.0
    %235 = vmatpush1.msra.mxu0 0.0
    %236 = vmatprep.subr.mxu0 0.0
    %237 = vmatpush1.msra.mxu0 0.0
    %238 = vmatprep.subr.mxu0 0.0
    %239 = vmatpush1.msra.mxu0 %v214
    %240 = vmatprep.subr.mxu0 0.0
    %241 = vmatpush1.msra.mxu0 %v213
    %242 = vmatprep.subr.mxu0 0.0
    %243 = vmatpush1.msra.mxu0 %v212
    %244 = vmatprep.subr.mxu0 0.0
    %245 = vmatpush1.msra.mxu0 %v211
    %246 = vmatprep.subr.mxu0 0.0
    %247 = vmatpush1.msra.mxu0 %v210
    %248 = vmatprep.subr.mxu0 0.0
    %249 = vmatpush1.msra.mxu0 %v209
    %250 = vmatprep.subr.mxu0 0.0
    %251 = vmatpush1.msra.mxu0 %v208
    %252 = vmatprep.subr.mxu0 0.0
    %253 = vmatpush1.msra.mxu0 %v207
    %254 = vmatprep.subr.mxu0 0.0
    %255 = vmatpush2.msra.mxu0 0.0
    %256 = vmatprep.subr.mxu0 0.0
    %257 = vmatpush2.msra.mxu0 0.0
    %258 = vmatprep.subr.mxu0 0.0
    %259 = vmatpush2.msra.mxu0 0.0
    %260 = vmatprep.subr.mxu0 0.0
    %261 = vmatpush2.msra.mxu0 0.0
    %262 = vmatprep.subr.mxu0 0.0
    %263 = vmatpush2.msra.mxu0 0.0
    %264 = vmatprep.subr.mxu0 0.0
    %265 = vmatpush2.msra.mxu0 0.0
    %266 = vmatprep.subr.mxu0 0.0
    %267 = vmatpush2.msra.mxu0 0.0
    %268 = vmatprep.subr.mxu0 0.0
    %269 = vmatpush2.msra.mxu0 0.0
    %270 = vmatprep.subr.mxu0 0.0
    %271 = vmatpush2.msra.mxu0 0.0
    %272 = vmatprep.subr.mxu0 0.0
    %273 = vmatpush2.msra.mxu0 0.0
    %274 = vmatprep.subr.mxu0 0.0
    %275 = vmatpush2.msra.mxu0 0.0
    %276 = vmatprep.subr.mxu0 0.0
    %277 = vmatpush2.msra.mxu0 0.0
    %278 = vmatprep.subr.mxu0 0.0
    %279 = vmatpush2.msra.mxu0 0.0
    %280 = vmatprep.subr.mxu0 0.0
    %281 = vmatpush2.msra.mxu0 0.0
    %282 = vmatprep.subr.mxu0 0.0
    %283 = vmatpush2.msra.mxu0 0.0
    %284 = vmatprep.subr.mxu0 0.0
    %285 = vmatpush2.msra.mxu0 0.0
    %286 = vmatprep.mubr.f32.mxu0 0.0
    %287 = vmatmul.mubr.f32.gmra.mxu0 %v220
    %v288 = vpop.f32.mrf.mxu0
    %v289 = vadd.f32 %v218, %v288
    %v290 = vpop.f32.mrf.mxu0
    %291 = vdwg.mxu0
    %v292 = vld [vmem:[#allocation7] sm:$0xff]
    %v293 = vld [vmem:[#allocation7 + $0x8] sm:$0xff]
    %v294 = vld [vmem:[#allocation7 + $0x10] sm:$0xff]
    %v295 = vld [vmem:[#allocation7 + $0x18] sm:$0xff]
    %v296 = vld [vmem:[#allocation7 + $0x20] sm:$0xff]
    %v297 = vld [vmem:[#allocation7 + $0x28] sm:$0xff]
    %v298 = vld [vmem:[#allocation7 + $0x30] sm:$0xff]
    %v299 = vld [vmem:[#allocation7 + $0x38] sm:$0xff]
    %v300 = vlaneseq
    %v301 = vshrl.u32 %v300, 7
    %v302 = vsub.s32 1, %v301
    %v303 = vrot.slane %v105, %v302
    %v305 = vsel %vm191, %v205, 0
    %307 = vmatprep.subr.mxu0 0.0
    %308 = vmatpush1.msra.mxu0 0.0
    %309 = vmatprep.subr.mxu0 0.0
    %310 = vmatpush1.msra.mxu0 0.0
    %311 = vmatprep.subr.mxu0 0.0
    %312 = vmatpush1.msra.mxu0 0.0
    %313 = vmatprep.subr.mxu0 0.0
    %314 = vmatpush1.msra.mxu0 0.0
    %315 = vmatprep.subr.mxu0 0.0
    %316 = vmatpush1.msra.mxu0 0.0
    %317 = vmatprep.subr.mxu0 0.0
    %318 = vmatpush1.msra.mxu0 0.0
    %319 = vmatprep.subr.mxu0 0.0
    %320 = vmatpush1.msra.mxu0 0.0
    %321 = vmatprep.subr.mxu0 0.0
    %322 = vmatpush1.msra.mxu0 0.0
    %323 = vmatprep.subr.mxu0 0.0
    %324 = vmatpush1.msra.mxu0 %v299
    %325 = vmatprep.subr.mxu0 0.0
    %326 = vmatpush1.msra.mxu0 %v298
    %327 = vmatprep.subr.mxu0 0.0
    %328 = vmatpush1.msra.mxu0 %v297
    %329 = vmatprep.subr.mxu0 0.0
    %330 = vmatpush1.msra.mxu0 %v296
    %331 = vmatprep.subr.mxu0 0.0
    %332 = vmatpush1.msra.mxu0 %v295
    %333 = vmatprep.subr.mxu0 0.0
    %334 = vmatpush1.msra.mxu0 %v294
    %335 = vmatprep.subr.mxu0 0.0
    %336 = vmatpush1.msra.mxu0 %v293
    %337 = vmatprep.subr.mxu0 0.0
    %338 = vmatpush1.msra.mxu0 %v292
    %339 = vmatprep.subr.mxu0 0.0
    %340 = vmatpush2.msra.mxu0 0.0
    %341 = vmatprep.subr.mxu0 0.0
    %342 = vmatpush2.msra.mxu0 0.0
    %343 = vmatprep.subr.mxu0 0.0
    %344 = vmatpush2.msra.mxu0 0.0
    %345 = vmatprep.subr.mxu0 0.0
    %346 = vmatpush2.msra.mxu0 0.0
    %347 = vmatprep.subr.mxu0 0.0
    %348 = vmatpush2.msra.mxu0 0.0
    %349 = vmatprep.subr.mxu0 0.0
    %350 = vmatpush2.msra.mxu0 0.0
    %351 = vmatprep.subr.mxu0 0.0
    %352 = vmatpush2.msra.mxu0 0.0
    %353 = vmatprep.subr.mxu0 0.0
    %354 = vmatpush2.msra.mxu0 0.0
    %355 = vmatprep.subr.mxu0 0.0
    %356 = vmatpush2.msra.mxu0 0.0
    %357 = vmatprep.subr.mxu0 0.0
    %358 = vmatpush2.msra.mxu0 0.0
    %359 = vmatprep.subr.mxu0 0.0
    %360 = vmatpush2.msra.mxu0 0.0
    %361 = vmatprep.subr.mxu0 0.0
    %362 = vmatpush2.msra.mxu0 0.0
    %363 = vmatprep.subr.mxu0 0.0
    %364 = vmatpush2.msra.mxu0 0.0
    %365 = vmatprep.subr.mxu0 0.0
    %366 = vmatpush2.msra.mxu0 0.0
    %367 = vmatprep.subr.mxu0 0.0
    %368 = vmatpush2.msra.mxu0 0.0
    %369 = vmatprep.subr.mxu0 0.0
    %370 = vmatpush2.msra.mxu0 0.0
    %371 = vmatprep.mubr.f32.mxu0 0.0
    %372 = vmatmul.mubr.f32.gmra.mxu0 %v305
    %v373 = vpop.f32.mrf.mxu0
    %v374 = vadd.f32 %v303, %v373
    %v375 = vpop.f32.mrf.mxu0
    %376 = vdwg.mxu0
    %v377 = vxor.u32 %v374, 2147483648
    %v378 = vmul.f32 %v377, 1.442695
    %v379 = vpow.pop %v378
    %v380 = vadd.f32 %v379, 1.0
    %v381 = vrcp.pop %v380
    %v382 = vmul.f32 1.0, %v381
    %v383 = vmul.f32 %v374, %v382
    %s384 = scalar_lea.vmem [#allocation8], 64
    %v385 = vld [vmem:[%s384] sm:$0xff]
    %v386 = vld [vmem:[%s384 + $0x8] sm:$0xff]
    %v387 = vld [vmem:[%s384 + $0x10] sm:$0xff]
    %v388 = vld [vmem:[%s384 + $0x18] sm:$0xff]
    %v389 = vld [vmem:[%s384 + $0x20] sm:$0xff]
    %v390 = vld [vmem:[%s384 + $0x28] sm:$0xff]
    %v391 = vld [vmem:[%s384 + $0x30] sm:$0xff]
    %v392 = vld [vmem:[%s384 + $0x38] sm:$0xff]
    %v393 = vlaneseq
    %v394 = vshrl.u32 %v393, 7
    %v395 = vsub.s32 3, %v394
    %v396 = vrot.slane %v105, %v395
    %v398 = vsel %vm191, %v383, 0
    %400 = vmatprep.subr.mxu0 0.0
    %401 = vmatpush1.msra.mxu0 0.0
    %402 = vmatprep.subr.mxu0 0.0
    %403 = vmatpush1.msra.mxu0 0.0
    %404 = vmatprep.subr.mxu0 0.0
    %405 = vmatpush1.msra.mxu0 0.0
    %406 = vmatprep.subr.mxu0 0.0
    %407 = vmatpush1.msra.mxu0 0.0
    %408 = vmatprep.subr.mxu0 0.0
    %409 = vmatpush1.msra.mxu0 0.0
    %410 = vmatprep.subr.mxu0 0.0
    %411 = vmatpush1.msra.mxu0 0.0
    %412 = vmatprep.subr.mxu0 0.0
    %413 = vmatpush1.msra.mxu0 0.0
    %414 = vmatprep.subr.mxu0 0.0
    %415 = vmatpush1.msra.mxu0 0.0
    %416 = vmatprep.subr.mxu0 0.0
    %417 = vmatpush1.msra.mxu0 %v392
    %418 = vmatprep.subr.mxu0 0.0
    %419 = vmatpush1.msra.mxu0 %v391
    %420 = vmatprep.subr.mxu0 0.0
    %421 = vmatpush1.msra.mxu0 %v390
    %422 = vmatprep.subr.mxu0 0.0
    %423 = vmatpush1.msra.mxu0 %v389
    %424 = vmatprep.subr.mxu0 0.0
    %425 = vmatpush1.msra.mxu0 %v388
    %426 = vmatprep.subr.mxu0 0.0
    %427 = vmatpush1.msra.mxu0 %v387
    %428 = vmatprep.subr.mxu0 0.0
    %429 = vmatpush1.msra.mxu0 %v386
    %430 = vmatprep.subr.mxu0 0.0
    %431 = vmatpush1.msra.mxu0 %v385
    %432 = vmatprep.subr.mxu0 0.0
    %433 = vmatpush2.msra.mxu0 0.0
    %434 = vmatprep.subr.mxu0 0.0
    %435 = vmatpush2.msra.mxu0 0.0
    %436 = vmatprep.subr.mxu0 0.0
    %437 = vmatpush2.msra.mxu0 0.0
    %438 = vmatprep.subr.mxu0 0.0
    %439 = vmatpush2.msra.mxu0 0.0
    %440 = vmatprep.subr.mxu0 0.0
    %441 = vmatpush2.msra.mxu0 0.0
    %442 = vmatprep.subr.mxu0 0.0
    %443 = vmatpush2.msra.mxu0 0.0
    %444 = vmatprep.subr.mxu0 0.0
    %445 = vmatpush2.msra.mxu0 0.0
    %446 = vmatprep.subr.mxu0 0.0
    %447 = vmatpush2.msra.mxu0 0.0
    %448 = vmatprep.subr.mxu0 0.0
    %449 = vmatpush2.msra.mxu0 0.0
    %450 = vmatprep.subr.mxu0 0.0
    %451 = vmatpush2.msra.mxu0 0.0
    %452 = vmatprep.subr.mxu0 0.0
    %453 = vmatpush2.msra.mxu0 0.0
    %454 = vmatprep.subr.mxu0 0.0
    %455 = vmatpush2.msra.mxu0 0.0
    %456 = vmatprep.subr.mxu0 0.0
    %457 = vmatpush2.msra.mxu0 0.0
    %458 = vmatprep.subr.mxu0 0.0
    %459 = vmatpush2.msra.mxu0 0.0
    %460 = vmatprep.subr.mxu0 0.0
    %461 = vmatpush2.msra.mxu0 0.0
    %462 = vmatprep.subr.mxu0 0.0
    %463 = vmatpush2.msra.mxu0 0.0
    %464 = vmatprep.mubr.f32.mxu0 0.0
    %465 = vmatmul.mubr.f32.gmra.mxu0 %v398
    %v466 = vpop.f32.mrf.mxu0
    %v467 = vadd.f32 %v396, %v466
    %v468 = vpop.f32.mrf.mxu0
    %469 = vdwg.mxu0
    %v470 = vadd.f32 %v467, %v289
    %v471 = vld [vmem:[#allocation8] sm:$0xff]
    %v472 = vld [vmem:[#allocation8 + $0x8] sm:$0xff]
    %v473 = vld [vmem:[#allocation8 + $0x10] sm:$0xff]
    %v474 = vld [vmem:[#allocation8 + $0x18] sm:$0xff]
    %v475 = vld [vmem:[#allocation8 + $0x20] sm:$0xff]
    %v476 = vld [vmem:[#allocation8 + $0x28] sm:$0xff]
    %v477 = vld [vmem:[#allocation8 + $0x30] sm:$0xff]
    %v478 = vld [vmem:[#allocation8 + $0x38] sm:$0xff]
    %v480 = vsel %vm191, %v470, 0
    %482 = vmatprep.subr.mxu0 0.0
    %483 = vmatpush1.msra.mxu0 0.0
    %484 = vmatprep.subr.mxu0 0.0
    %485 = vmatpush1.msra.mxu0 0.0
    %486 = vmatprep.subr.mxu0 0.0
    %487 = vmatpush1.msra.mxu0 0.0
    %488 = vmatprep.subr.mxu0 0.0
    %489 = vmatpush1.msra.mxu0 0.0
    %490 = vmatprep.subr.mxu0 0.0
    %491 = vmatpush1.msra.mxu0 0.0
    %492 = vmatprep.subr.mxu0 0.0
    %493 = vmatpush1.msra.mxu0 0.0
    %494 = vmatprep.subr.mxu0 0.0
    %495 = vmatpush1.msra.mxu0 0.0
    %496 = vmatprep.subr.mxu0 0.0
    %497 = vmatpush1.msra.mxu0 0.0
    %498 = vmatprep.subr.mxu0 0.0
    %499 = vmatpush1.msra.mxu0 %v478
    %500 = vmatprep.subr.mxu0 0.0
    %501 = vmatpush1.msra.mxu0 %v477
    %502 = vmatprep.subr.mxu0 0.0
    %503 = vmatpush1.msra.mxu0 %v476
    %504 = vmatprep.subr.mxu0 0.0
    %505 = vmatpush1.msra.mxu0 %v475
    %506 = vmatprep.subr.mxu0 0.0
    %507 = vmatpush1.msra.mxu0 %v474
    %508 = vmatprep.subr.mxu0 0.0
    %509 = vmatpush1.msra.mxu0 %v473
    %510 = vmatprep.subr.mxu0 0.0
    %511 = vmatpush1.msra.mxu0 %v472
    %512 = vmatprep.subr.mxu0 0.0
    %513 = vmatpush1.msra.mxu0 %v471
    %514 = vmatprep.subr.mxu0 0.0
    %515 = vmatpush2.msra.mxu0 0.0
    %516 = vmatprep.subr.mxu0 0.0
    %517 = vmatpush2.msra.mxu0 0.0
    %518 = vmatprep.subr.mxu0 0.0
    %519 = vmatpush2.msra.mxu0 0.0
    %520 = vmatprep.subr.mxu0 0.0
    %521 = vmatpush2.msra.mxu0 0.0
    %522 = vmatprep.subr.mxu0 0.0
    %523 = vmatpush2.msra.mxu0 0.0
    %524 = vmatprep.subr.mxu0 0.0
    %525 = vmatpush2.msra.mxu0 0.0
    %526 = vmatprep.subr.mxu0 0.0
    %527 = vmatpush2.msra.mxu0 0.0
    %528 = vmatprep.subr.mxu0 0.0
    %529 = vmatpush2.msra.mxu0 0.0
    %530 = vmatprep.subr.mxu0 0.0
    %531 = vmatpush2.msra.mxu0 0.0
    %532 = vmatprep.subr.mxu0 0.0
    %533 = vmatpush2.msra.mxu0 0.0
    %534 = vmatprep.subr.mxu0 0.0
    %535 = vmatpush2.msra.mxu0 0.0
    %536 = vmatprep.subr.mxu0 0.0
    %537 = vmatpush2.msra.mxu0 0.0
    %538 = vmatprep.subr.mxu0 0.0
    %539 = vmatpush2.msra.mxu0 0.0
    %540 = vmatprep.subr.mxu0 0.0
    %541 = vmatpush2.msra.mxu0 0.0
    %542 = vmatprep.subr.mxu0 0.0
    %543 = vmatpush2.msra.mxu0 0.0
    %544 = vmatprep.subr.mxu0 0.0
    %545 = vmatpush2.msra.mxu0 0.0
    %546 = vmatprep.mubr.f32.mxu0 0.0
    %547 = vmatmul.mubr.f32.gmra.mxu0 %v480
    %v548 = vpop.f32.mrf.mxu0
    %v549 = vadd.f32 0.0, %v548
    %v550 = vpop.f32.mrf.mxu0
    %551 = vdwg.mxu0
    %v552 = vsub.f32 %v470, %v549
    %v553 = vmul.f32 %v552, %v552
    %v555 = vsel %vm191, %v553, 0
    %557 = vmatprep.subr.mxu0 0.0
    %558 = vmatpush1.msra.mxu0 0.0
    %559 = vmatprep.subr.mxu0 0.0
    %560 = vmatpush1.msra.mxu0 0.0
    %561 = vmatprep.subr.mxu0 0.0
    %562 = vmatpush1.msra.mxu0 0.0
    %563 = vmatprep.subr.mxu0 0.0
    %564 = vmatpush1.msra.mxu0 0.0
    %565 = vmatprep.subr.mxu0 0.0
    %566 = vmatpush1.msra.mxu0 0.0
    %567 = vmatprep.subr.mxu0 0.0
    %568 = vmatpush1.msra.mxu0 0.0
    %569 = vmatprep.subr.mxu0 0.0
    %570 = vmatpush1.msra.mxu0 0.0
    %571 = vmatprep.subr.mxu0 0.0
    %572 = vmatpush1.msra.mxu0 0.0
    %573 = vmatprep.subr.mxu0 0.0
    %574 = vmatpush1.msra.mxu0 %v478
    %575 = vmatprep.subr.mxu0 0.0
    %576 = vmatpush1.msra.mxu0 %v477
    %577 = vmatprep.subr.mxu0 0.0
    %578 = vmatpush1.msra.mxu0 %v476
    %579 = vmatprep.subr.mxu0 0.0
    %580 = vmatpush1.msra.mxu0 %v475
    %581 = vmatprep.subr.mxu0 0.0
    %582 = vmatpush1.msra.mxu0 %v474
    %583 = vmatprep.subr.mxu0 0.0
    %584 = vmatpush1.msra.mxu0 %v473
    %585 = vmatprep.subr.mxu0 0.0
    %586 = vmatpush1.msra.mxu0 %v472
    %587 = vmatprep.subr.mxu0 0.0
    %588 = vmatpush1.msra.mxu0 %v471
    %589 = vmatprep.subr.mxu0 0.0
    %590 = vmatpush2.msra.mxu0 0.0
    %591 = vmatprep.subr.mxu0 0.0
    %592 = vmatpush2.msra.mxu0 0.0
    %593 = vmatprep.subr.mxu0 0.0
    %594 = vmatpush2.msra.mxu0 0.0
    %595 = vmatprep.subr.mxu0 0.0
    %596 = vmatpush2.msra.mxu0 0.0
    %597 = vmatprep.subr.mxu0 0.0
    %598 = vmatpush2.msra.mxu0 0.0
    %599 = vmatprep.subr.mxu0 0.0
    %600 = vmatpush2.msra.mxu0 0.0
    %601 = vmatprep.subr.mxu0 0.0
    %602 = vmatpush2.msra.mxu0 0.0
    %603 = vmatprep.subr.mxu0 0.0
    %604 = vmatpush2.msra.mxu0 0.0
    %605 = vmatprep.subr.mxu0 0.0
    %606 = vmatpush2.msra.mxu0 0.0
    %607 = vmatprep.subr.mxu0 0.0
    %608 = vmatpush2.msra.mxu0 0.0
    %609 = vmatprep.subr.mxu0 0.0
    %610 = vmatpush2.msra.mxu0 0.0
    %611 = vmatprep.subr.mxu0 0.0
    %612 = vmatpush2.msra.mxu0 0.0
    %613 = vmatprep.subr.mxu0 0.0
    %614 = vmatpush2.msra.mxu0 0.0
    %615 = vmatprep.subr.mxu0 0.0
    %616 = vmatpush2.msra.mxu0 0.0
    %617 = vmatprep.subr.mxu0 0.0
    %618 = vmatpush2.msra.mxu0 0.0
    %619 = vmatprep.subr.mxu0 0.0
    %620 = vmatpush2.msra.mxu0 0.0
    %621 = vmatprep.mubr.f32.mxu0 0.0
    %622 = vmatmul.mubr.f32.gmra.mxu0 %v555
    %v623 = vpop.f32.mrf.mxu0
    %v624 = vadd.f32 1e-05, %v623
    %v625 = vpop.f32.mrf.mxu0
    %626 = vdwg.mxu0
    %v627 = vrsqrt.pop %v624
    %v628 = vmul.f32 %v552, %v627
    %v629 = vlaneseq
    %v630 = vshrl.u32 %v629, 7
    %v631 = vsub.s32 4, %v630
    %v632 = vrot.slane %v105, %v631
    %v633 = vmul.f32 %v628, %v632
    %v634 = vlaneseq
    %v635 = vshrl.u32 %v634, 7
    %v636 = vsub.s32 5, %v635
    %v637 = vrot.slane %v105, %v636
    %v638 = vadd.f32 %v633, %v637
    %s639 = scalar_lea.vmem [#allocation8], 128
    %v640 = vld [vmem:[%s639] sm:$0xff]
    %v641 = vld [vmem:[%s639 + $0x8] sm:$0xff]
    %v642 = vld [vmem:[%s639 + $0x10] sm:$0xff]
    %v643 = vld [vmem:[%s639 + $0x18] sm:$0xff]
    %v644 = vld [vmem:[%s639 + $0x20] sm:$0xff]
    %v645 = vld [vmem:[%s639 + $0x28] sm:$0xff]
    %v646 = vld [vmem:[%s639 + $0x30] sm:$0xff]
    %v647 = vld [vmem:[%s639 + $0x38] sm:$0xff]
    %v648 = vlaneseq
    %v649 = vshrl.u32 %v648, 7
    %v650 = vsub.s32 6, %v649
    %v651 = vrot.slane %v105, %v650
    %v653 = vsel %vm191, %v638, 0
    %655 = vmatprep.subr.mxu0 0.0
    %656 = vmatpush1.msra.mxu0 0.0
    %657 = vmatprep.subr.mxu0 0.0
    %658 = vmatpush1.msra.mxu0 0.0
    %659 = vmatprep.subr.mxu0 0.0
    %660 = vmatpush1.msra.mxu0 0.0
    %661 = vmatprep.subr.mxu0 0.0
    %662 = vmatpush1.msra.mxu0 0.0
    %663 = vmatprep.subr.mxu0 0.0
    %664 = vmatpush1.msra.mxu0 0.0
    %665 = vmatprep.subr.mxu0 0.0
    %666 = vmatpush1.msra.mxu0 0.0
    %667 = vmatprep.subr.mxu0 0.0
    %668 = vmatpush1.msra.mxu0 0.0
    %669 = vmatprep.subr.mxu0 0.0
    %670 = vmatpush1.msra.mxu0 0.0
    %671 = vmatprep.subr.mxu0 0.0
    %672 = vmatpush1.msra.mxu0 %v647
    %673 = vmatprep.subr.mxu0 0.0
    %674 = vmatpush1.msra.mxu0 %v646
    %675 = vmatprep.subr.mxu0 0.0
    %676 = vmatpush1.msra.mxu0 %v645
    %677 = vmatprep.subr.mxu0 0.0
    %678 = vmatpush1.msra.mxu0 %v644
    %679 = vmatprep.subr.mxu0 0.0
    %680 = vmatpush1.msra.mxu0 %v643
    %681 = vmatprep.subr.mxu0 0.0
    %682 = vmatpush1.msra.mxu0 %v642
    %683 = vmatprep.subr.mxu0 0.0
    %684 = vmatpush1.msra.mxu0 %v641
    %685 = vmatprep.subr.mxu0 0.0
    %686 = vmatpush1.msra.mxu0 %v640
    %687 = vmatprep.subr.mxu0 0.0
    %688 = vmatpush2.msra.mxu0 0.0
    %689 = vmatprep.subr.mxu0 0.0
    %690 = vmatpush2.msra.mxu0 0.0
    %691 = vmatprep.subr.mxu0 0.0
    %692 = vmatpush2.msra.mxu0 0.0
    %693 = vmatprep.subr.mxu0 0.0
    %694 = vmatpush2.msra.mxu0 0.0
    %695 = vmatprep.subr.mxu0 0.0
    %696 = vmatpush2.msra.mxu0 0.0
    %697 = vmatprep.subr.mxu0 0.0
    %698 = vmatpush2.msra.mxu0 0.0
    %699 = vmatprep.subr.mxu0 0.0
    %700 = vmatpush2.msra.mxu0 0.0
    %701 = vmatprep.subr.mxu0 0.0
    %702 = vmatpush2.msra.mxu0 0.0
    %703 = vmatprep.subr.mxu0 0.0
    %704 = vmatpush2.msra.mxu0 0.0
    %705 = vmatprep.subr.mxu0 0.0
    %706 = vmatpush2.msra.mxu0 0.0
    %707 = vmatprep.subr.mxu0 0.0
    %708 = vmatpush2.msra.mxu0 0.0
    %709 = vmatprep.subr.mxu0 0.0
    %710 = vmatpush2.msra.mxu0 0.0
    %711 = vmatprep.subr.mxu0 0.0
    %712 = vmatpush2.msra.mxu0 0.0
    %713 = vmatprep.subr.mxu0 0.0
    %714 = vmatpush2.msra.mxu0 0.0
    %715 = vmatprep.subr.mxu0 0.0
    %716 = vmatpush2.msra.mxu0 0.0
    %717 = vmatprep.subr.mxu0 0.0
    %718 = vmatpush2.msra.mxu0 0.0
    %719 = vmatprep.mubr.f32.mxu0 0.0
    %720 = vmatmul.mubr.f32.gmra.mxu0 %v653
    %v721 = vpop.f32.mrf.mxu0
    %v722 = vadd.f32 %v651, %v721
    %v723 = vpop.f32.mrf.mxu0
    %724 = vdwg.mxu0
    %v725 = vxor.u32 %v722, 2147483648
    %v726 = vmul.f32 %v725, 1.442695
    %v727 = vpow.pop %v726
    %v728 = vadd.f32 %v727, 1.0
    %v729 = vrcp.pop %v728
    %v730 = vmul.f32 1.0, %v729
    %v731 = vmul.f32 %v722, %v730
    %s732 = scalar_lea.vmem [#allocation8], 192
    %v733 = vld [vmem:[%s732] sm:$0xff]
    %v734 = vld [vmem:[%s732 + $0x8] sm:$0xff]
    %v735 = vld [vmem:[%s732 + $0x10] sm:$0xff]
    %v736 = vld [vmem:[%s732 + $0x18] sm:$0xff]
    %v737 = vld [vmem:[%s732 + $0x20] sm:$0xff]
    %v738 = vld [vmem:[%s732 + $0x28] sm:$0xff]
    %v739 = vld [vmem:[%s732 + $0x30] sm:$0xff]
    %v740 = vld [vmem:[%s732 + $0x38] sm:$0xff]
    %v741 = vlaneseq
    %v742 = vshrl.u32 %v741, 7
    %v743 = vsub.s32 7, %v742
    %v744 = vrot.slane %v105, %v743
    %v746 = vsel %vm191, %v731, 0
    %748 = vmatprep.subr.mxu0 0.0
    %749 = vmatpush1.msra.mxu0 0.0
    %750 = vmatprep.subr.mxu0 0.0
    %751 = vmatpush1.msra.mxu0 0.0
    %752 = vmatprep.subr.mxu0 0.0
    %753 = vmatpush1.msra.mxu0 0.0
    %754 = vmatprep.subr.mxu0 0.0
    %755 = vmatpush1.msra.mxu0 0.0
    %756 = vmatprep.subr.mxu0 0.0
    %757 = vmatpush1.msra.mxu0 0.0
    %758 = vmatprep.subr.mxu0 0.0
    %759 = vmatpush1.msra.mxu0 0.0
    %760 = vmatprep.subr.mxu0 0.0
    %761 = vmatpush1.msra.mxu0 0.0
    %762 = vmatprep.subr.mxu0 0.0
    %763 = vmatpush1.msra.mxu0 0.0
    %764 = vmatprep.subr.mxu0 0.0
    %765 = vmatpush1.msra.mxu0 %v740
    %766 = vmatprep.subr.mxu0 0.0
    %767 = vmatpush1.msra.mxu0 %v739
    %768 = vmatprep.subr.mxu0 0.0
    %769 = vmatpush1.msra.mxu0 %v738
    %770 = vmatprep.subr.mxu0 0.0
    %771 = vmatpush1.msra.mxu0 %v737
    %772 = vmatprep.subr.mxu0 0.0
    %773 = vmatpush1.msra.mxu0 %v736
    %774 = vmatprep.subr.mxu0 0.0
    %775 = vmatpush1.msra.mxu0 %v735
    %776 = vmatprep.subr.mxu0 0.0
    %777 = vmatpush1.msra.mxu0 %v734
    %778 = vmatprep.subr.mxu0 0.0
    %779 = vmatpush1.msra.mxu0 %v733
    %780 = vmatprep.subr.mxu0 0.0
    %781 = vmatpush2.msra.mxu0 0.0
    %782 = vmatprep.subr.mxu0 0.0
    %783 = vmatpush2.msra.mxu0 0.0
    %784 = vmatprep.subr.mxu0 0.0
    %785 = vmatpush2.msra.mxu0 0.0
    %786 = vmatprep.subr.mxu0 0.0
    %787 = vmatpush2.msra.mxu0 0.0
    %788 = vmatprep.subr.mxu0 0.0
    %789 = vmatpush2.msra.mxu0 0.0
    %790 = vmatprep.subr.mxu0 0.0
    %791 = vmatpush2.msra.mxu0 0.0
    %792 = vmatprep.subr.mxu0 0.0
    %793 = vmatpush2.msra.mxu0 0.0
    %794 = vmatprep.subr.mxu0 0.0
    %795 = vmatpush2.msra.mxu0 0.0
    %796 = vmatprep.subr.mxu0 0.0
    %797 = vmatpush2.msra.mxu0 0.0
    %798 = vmatprep.subr.mxu0 0.0
    %799 = vmatpush2.msra.mxu0 0.0
    %800 = vmatprep.subr.mxu0 0.0
    %801 = vmatpush2.msra.mxu0 0.0
    %802 = vmatprep.subr.mxu0 0.0
    %803 = vmatpush2.msra.mxu0 0.0
    %804 = vmatprep.subr.mxu0 0.0
    %805 = vmatpush2.msra.mxu0 0.0
    %806 = vmatprep.subr.mxu0 0.0
    %807 = vmatpush2.msra.mxu0 0.0
    %808 = vmatprep.subr.mxu0 0.0
    %809 = vmatpush2.msra.mxu0 0.0
    %810 = vmatprep.subr.mxu0 0.0
    %811 = vmatpush2.msra.mxu0 0.0
    %812 = vmatprep.mubr.f32.mxu0 0.0
    %813 = vmatmul.mubr.f32.gmra.mxu0 %v746
    %v814 = vpop.f32.mrf.mxu0
    %v815 = vadd.f32 %v744, %v814
    %v816 = vpop.f32.mrf.mxu0
    %817 = vdwg.mxu0
    %v818 = vadd.f32 %v815, %v470
    %v819 = vlaneseq
    %v820 = vshrl.u32 %v819, 7
    %v821 = vsub.s32 0, %v820
    %v822 = vrot.slane %v106, %v821
    %v823 = vmul.f32 %v818, %v822
    %v824 = vlaneseq
    %v825 = vshrl.u32 %v824, 7
    %v826 = vsub.s32 1, %v825
    %v827 = vrot.slane %v106, %v826
    %v828 = vadd.f32 %v823, %v827
    %v829 = vxor.u32 %v828, 2147483648
    %v830 = vmul.f32 %v829, 1.442695
    %v831 = vpow.pop %v830
    %v832 = vadd.f32 %v831, 1.0
    %v833 = vrcp.pop %v832
    %v834 = vmul.f32 1.0, %v833
    %v835 = vmul.f32 %v828, %v834
    %v836 = vld [vmem:[#allocation10] sm:$0xff]
    %v837 = vld [vmem:[#allocation10 + $0x8] sm:$0xff]
    %v838 = vld [vmem:[#allocation10 + $0x10] sm:$0xff]
    %v839 = vld [vmem:[#allocation10 + $0x18] sm:$0xff]
    %v840 = vld [vmem:[#allocation10 + $0x20] sm:$0xff]
    %v841 = vld [vmem:[#allocation10 + $0x28] sm:$0xff]
    %v842 = vld [vmem:[#allocation10 + $0x30] sm:$0xff]
    %v843 = vld [vmem:[#allocation10 + $0x38] sm:$0xff]
    %v844 = vlaneseq
    %v845 = vshrl.u32 %v844, 7
    %v846 = vsub.s32 2, %v845
    %v847 = vrot.slane %v106, %v846
    %v849 = vsel %vm191, %v835, 0
    %851 = vmatprep.subr.mxu0 0.0
    %852 = vmatpush1.msra.mxu0 0.0
    %853 = vmatprep.subr.mxu0 0.0
    %854 = vmatpush1.msra.mxu0 0.0
    %855 = vmatprep.subr.mxu0 0.0
    %856 = vmatpush1.msra.mxu0 0.0
    %857 = vmatprep.subr.mxu0 0.0
    %858 = vmatpush1.msra.mxu0 0.0
    %859 = vmatprep.subr.mxu0 0.0
    %860 = vmatpush1.msra.mxu0 0.0
    %861 = vmatprep.subr.mxu0 0.0
    %862 = vmatpush1.msra.mxu0 0.0
    %863 = vmatprep.subr.mxu0 0.0
    %864 = vmatpush1.msra.mxu0 0.0
    %865 = vmatprep.subr.mxu0 0.0
    %866 = vmatpush1.msra.mxu0 0.0
    %867 = vmatprep.subr.mxu0 0.0
    %868 = vmatpush1.msra.mxu0 %v843
    %869 = vmatprep.subr.mxu0 0.0
    %870 = vmatpush1.msra.mxu0 %v842
    %871 = vmatprep.subr.mxu0 0.0
    %872 = vmatpush1.msra.mxu0 %v841
    %873 = vmatprep.subr.mxu0 0.0
    %874 = vmatpush1.msra.mxu0 %v840
    %875 = vmatprep.subr.mxu0 0.0
    %876 = vmatpush1.msra.mxu0 %v839
    %877 = vmatprep.subr.mxu0 0.0
    %878 = vmatpush1.msra.mxu0 %v838
    %879 = vmatprep.subr.mxu0 0.0
    %880 = vmatpush1.msra.mxu0 %v837
    %881 = vmatprep.subr.mxu0 0.0
    %882 = vmatpush1.msra.mxu0 %v836
    %883 = vmatprep.subr.mxu0 0.0
    %884 = vmatpush2.msra.mxu0 0.0
    %885 = vmatprep.subr.mxu0 0.0
    %886 = vmatpush2.msra.mxu0 0.0
    %887 = vmatprep.subr.mxu0 0.0
    %888 = vmatpush2.msra.mxu0 0.0
    %889 = vmatprep.subr.mxu0 0.0
    %890 = vmatpush2.msra.mxu0 0.0
    %891 = vmatprep.subr.mxu0 0.0
    %892 = vmatpush2.msra.mxu0 0.0
    %893 = vmatprep.subr.mxu0 0.0
    %894 = vmatpush2.msra.mxu0 0.0
    %895 = vmatprep.subr.mxu0 0.0
    %896 = vmatpush2.msra.mxu0 0.0
    %897 = vmatprep.subr.mxu0 0.0
    %898 = vmatpush2.msra.mxu0 0.0
    %899 = vmatprep.subr.mxu0 0.0
    %900 = vmatpush2.msra.mxu0 0.0
    %901 = vmatprep.subr.mxu0 0.0
    %902 = vmatpush2.msra.mxu0 0.0
    %903 = vmatprep.subr.mxu0 0.0
    %904 = vmatpush2.msra.mxu0 0.0
    %905 = vmatprep.subr.mxu0 0.0
    %906 = vmatpush2.msra.mxu0 0.0
    %907 = vmatprep.subr.mxu0 0.0
    %908 = vmatpush2.msra.mxu0 0.0
    %909 = vmatprep.subr.mxu0 0.0
    %910 = vmatpush2.msra.mxu0 0.0
    %911 = vmatprep.subr.mxu0 0.0
    %912 = vmatpush2.msra.mxu0 0.0
    %913 = vmatprep.subr.mxu0 0.0
    %914 = vmatpush2.msra.mxu0 0.0
    %915 = vmatprep.mubr.f32.mxu0 0.0
    %916 = vmatmul.mubr.f32.gmra.mxu0 %v849
    %v917 = vpop.f32.mrf.mxu0
    %v918 = vadd.f32 %v847, %v917
    %v919 = vpop.f32.mrf.mxu0
    %920 = vdwg.mxu0
    %921 = vst [vmem:[#allocation13] sm:$0xff] %v918
    // Predicated region
    $region50: #{tpu_custom_call.1} parent=1 // pred_check
      _
    $region51: #{tpu_custom_call.1} parent=1 // pred_check_branch
      %923 = sbr.rel (0) target = $region53
    $region52: #{tpu_custom_call.1} parent=1 // pred_region
      %s925 = ssub.s32 128, 128
      %926 = vsyncadd [#allocation4], %s925
      %s928 = sshll.u32 [#allocation13], 4
      %s929 = int_to_ptr.vmem [resolvable:$true] %s928
      %931 = dma.vmem_to_hbm [thread:$0]  %s929, 128, %s6, [#allocation4]
    $region53: #{tpu_custom_call.1} parent=1 // pred_fallthru
      _
    // Predicated region
    $region54: #{tpu_custom_call.1} parent=1 // pred_check
      _
    $region55: #{tpu_custom_call.1} parent=1 // pred_check_branch
      %933 = sbr.rel (0) target = $region57
    $region56: #{tpu_custom_call.1} parent=1 // pred_region
      %934 = dma.done [#allocation4], 128
    $region57: #{tpu_custom_call.1} parent=1 // pred_fallthru
      _
    %935 = vsyncpa [#allocation3], 1
    %936 = vsyncpa [#allocation6], 1
    %937 = vsyncpa [#allocation9], 1
    %938 = vsyncpa [#allocation12], 1
    %939 = vsyncpa [#allocation4], 1

</llo_original>
